<compile_context>
chip_gen: v7x
topology: tpu7x:2x2x1
jax: 0.10.0
libtpu: 0.0.40
codegen_flags: <defaults>
</compile_context>

<pallas_src>
import functools

import jax
import jax.numpy as jnp
from jax import lax
from jax.experimental import pallas as pl
from jax.experimental.pallas import tpu as pltpu


def _round_up(x: int, m: int) -> int:
    return (x + m - 1) // m * m


def _cdiv(a: int, b: int) -> int:
    return -(-a // b)


def _vmem_capacity_bytes() -> int:
    """Per-core VMEM capacity; conservative fallback if the query is unavailable."""
    try:
        info = pltpu.get_tpu_info()
        for name in ("vmem_capacity_bytes", "vmem_size_bytes", "vmem_bytes"):
            v = getattr(info, name, None)
            if v:
                return int(v)
    except Exception:
        pass
    return 64 * 1024 * 1024  # v7x per-TC size; safe lower bound everywhere


def ae_forward_kernel(
    data_ref,         # (TB, Mp)  bf16   row tile of the (padded) input
    ubias_ref,        # (TB, 1)   f32    user_bias[users] (gathered in glue)
    w1_ref, b1_ref,   # (Mp, Hp)  bf16, (1, Hp) f32   encoder linear 1
    w2_ref, b2_ref,   # (Hp, Lp)  bf16, (1, Lp) f32   encoder linear 2
    w3_ref, b3_ref,   # (Lp, Hp)  bf16, (1, Hp) f32   decoder linear 1
    w4_ref, b4m_ref,  # (Hp, Mp)  bf16, (1, Mp) f32   decoder linear 2 bias + movie_bias
    recon_ref,        # out: (TB, Mp) recon_dtype
    z_ref,            # out: (TB, Lp) f32
):
    f32 = jnp.float32
    cdt = w1_ref.dtype  # MXU operand dtype (bf16)

    x = data_ref[...]                                   # bf16 (TB, Mp)
    xf = x.astype(f32)
    sumsq = jnp.sum(xf * xf, axis=1, keepdims=True)     # (TB, 1) f32
    # F.normalize(data): x / max(||x||_2, 1e-12) == x * rsqrt(max(sum(x^2), 1e-24))
    inv = lax.rsqrt(jnp.maximum(sumsq, 1e-24))

    # encoder: Dropout(id) -> Linear -> ReLU -> Dropout(id) -> Linear
    # Fold the per-row L2 scale through the matmul: diag(s)·(X·W1) == (diag(s)·X)·W1
    h1 = jnp.dot(x, w1_ref[...], preferred_element_type=f32)
    h1 = jnp.maximum(h1 * inv + b1_ref[...], 0.0)
    z = jnp.dot(h1.astype(cdt), w2_ref[...], preferred_element_type=f32)
    z = z + b2_ref[...]

    # decoder: Linear -> ReLU -> Dropout(id) -> Linear
    h2 = jnp.dot(z.astype(cdt), w3_ref[...], preferred_element_type=f32)
    h2 = jnp.maximum(h2 + b3_ref[...], 0.0)
    recon = jnp.dot(h2.astype(cdt), w4_ref[...], preferred_element_type=f32)

    # (b4 + movie_bias) is pre-combined; user bias broadcasts along movies.
    recon = recon + b4m_ref[...] + ubias_ref[...]

    recon_ref[...] = recon.astype(recon_ref.dtype)
    z_ref[...] = z.astype(z_ref.dtype)


def prepare_params(params):
    """Pad to lane-dense (128) dims and cast ONCE; cache the result across calls."""
    f32, bf16 = jnp.float32, jnp.bfloat16
    M, H = params["w1"].shape
    L = params["w2"].shape[1]
    Mp, Hp, Lp = _round_up(M, 128), _round_up(H, 128), _round_up(L, 128)

    def pad2(a, r, c):
        return jnp.pad(a, ((0, r - a.shape[0]), (0, c - a.shape[1])))

    return {
        "w1": pad2(params["w1"].astype(bf16), Mp, Hp),
        "b1": pad2(params["b1"].astype(f32), 1, Hp),
        "w2": pad2(params["w2"].astype(bf16), Hp, Lp),
        "b2": pad2(params["b2"].astype(f32), 1, Lp),
        "w3": pad2(params["w3"].astype(bf16), Lp, Hp),
        "b3": pad2(params["b3"].astype(f32), 1, Hp),
        "w4": pad2(params["w4"].astype(bf16), Hp, Mp),
        # decoder output bias and movie bias are always added together: combine.
        "b4m": pad2((params["b4"].astype(f32) + params["movie_bias"].astype(f32)), 1, Mp),
        "user_bias": params["user_bias"].astype(f32),     # (num_users, 1)
    }


@functools.partial(jax.jit, static_argnames=("latent_dim", "batch_tile", "recon_dtype"))
def ae_forward(data, users, padded_params, *, latent_dim, batch_tile=256,
               recon_dtype=jnp.float32):
    f32, bf16 = jnp.float32, jnp.bfloat16
    pp = padded_params
    B, M = data.shape
    Mp, Hp = pp["w1"].shape
    Lp = pp["w2"].shape[1]
    L = latent_dim

    recon_isz = jnp.dtype(recon_dtype).itemsize
    w_bytes = (Mp * Hp + Hp * Lp + Lp * Hp + Hp * Mp) * 2 + (2 * Hp + Lp + Mp) * 4

    # ---- batch tile selection (generation-aware) -------------------------------
    # Aim for >=2 grid steps (so v7x megacore has work on both cores) and a
    # mostly-full final tile, then shrink until the VMEM estimate fits ~90% of
    # this generation's capacity.
    if B > 8:
        n_target = max(2, _cdiv(B, batch_tile))
    else:
        n_target = 1
    TB = min(_round_up(_cdiv(B, n_target), 8), _round_up(batch_tile, 8))

    budget = int(0.90 * _vmem_capacity_bytes())

    def tile_bytes(tb):
        # double-buffered pipelined operands/outputs
        pipelined = 2 * (tb * Mp * 2          # data (bf16)
                         + tb * 128 * 4       # user bias tile (padded lane)
                         + tb * Mp * recon_isz
                         + tb * Lp * 4)       # z
        # in-kernel intermediates: f32 x copy, h1/h2, z, f32 recon acc, bf16 casts
        interm = tb * (2 * Mp * 4 + 2 * Hp * 4 + 2 * Lp * 4 + (2 * Hp + Lp) * 2)
        return pipelined + interm

    while TB > 8 and w_bytes + tile_bytes(TB) > budget:
        TB = _round_up(TB // 2, 8)

    Bp = _round_up(B, TB)
    n_tiles = Bp // TB

    # ---- per-call glue: pad data (bf16) and gather user bias -------------------
    data_p = jnp.pad(data.astype(bf16), ((0, Bp - B), (0, Mp - M)))
    ubias = jnp.pad(pp["user_bias"][users], ((0, Bp - B), (0, 0)))

    def row_map(i):        # row-tiled operands / outputs
        return (i, 0)

    resident = pl.BlockSpec(memory_space=pltpu.MemorySpace.VMEM)  # whole array, 1 copy

    grid_spec = pltpu.PrefetchScalarGridSpec(
        num_scalar_prefetch=0,
        grid=(n_tiles,),
        in_specs=[
            pl.BlockSpec((TB, Mp), row_map),   # data
            pl.BlockSpec((TB, 1), row_map),    # user bias (gathered)
            resident,                          # w1
            resident,                          # b1
            resident,                          # w2
            resident,                          # b2
            resident,                          # w3
            resident,                          # b3
            resident,                          # w4
            resident,                          # b4 + movie_bias
        ],
        out_specs=(
            pl.BlockSpec((TB, Mp), row_map),   # recon
            pl.BlockSpec((TB, Lp), row_map),   # z
        ),
    )

    cost = pl.CostEstimate(
        flops=2 * Bp * (Mp * Hp + Hp * Lp + Lp * Hp + Hp * Mp),
        transcendentals=Bp,
        bytes_accessed=Bp * Mp * 2 + Bp * 4 + w_bytes + Bp * Mp * recon_isz + Bp * Lp * 4,
    )

    recon_p, z_p = pl.pallas_call(
        ae_forward_kernel,
        out_shape=(
            jax.ShapeDtypeStruct((Bp, Mp), recon_dtype),
            jax.ShapeDtypeStruct((Bp, Lp), f32),
        ),
        grid_spec=grid_spec,
        compiler_params=pltpu.CompilerParams(
            dimension_semantics=("parallel",),
            vmem_limit_bytes=budget,
        ),
        cost_estimate=cost,
    )(data_p, ubias, pp["w1"], pp["b1"], pp["w2"], pp["b2"],
      pp["w3"], pp["b3"], pp["w4"], pp["b4m"])

    return recon_p[:B, :M], z_p[:B, :L]


def init_params(key, num_users, num_movies, hidden_dim, latent_dim):
    ks = jax.random.split(key, 8)
    s = 0.05
    f32 = jnp.float32
    return {
        # weights stored as (in_features, out_features)
        "w1": s * jax.random.normal(ks[0], (num_movies, hidden_dim), f32),
        "b1": s * jax.random.normal(ks[1], (1, hidden_dim), f32),
        "w2": s * jax.random.normal(ks[2], (hidden_dim, latent_dim), f32),
        "b2": s * jax.random.normal(ks[3], (1, latent_dim), f32),
        "w3": s * jax.random.normal(ks[4], (latent_dim, hidden_dim), f32),
        "b3": s * jax.random.normal(ks[5], (1, hidden_dim), f32),
        "w4": s * jax.random.normal(ks[6], (hidden_dim, num_movies), f32),
        "b4": s * jax.random.normal(ks[7], (1, num_movies), f32),
        # as in the PyTorch module: initialized to ones
        "user_bias": jnp.ones((num_users, 1), f32),
        "movie_bias": jnp.ones((1, num_movies), f32),
    }


def ae_forward_ref(data, users, params):
    """Plain-JAX reference mirroring the kernel numerics (bf16 operands, f32 acc,
    L2 scale folded after the first matmul)."""
    f32, bf16 = jnp.float32, jnp.bfloat16
    x = data.astype(bf16)
    xf = x.astype(f32)
    inv = lax.rsqrt(jnp.maximum(jnp.sum(xf * xf, axis=1, keepdims=True), 1e-24))
    h1 = jnp.dot(x, params["w1"].astype(bf16), preferred_element_type=f32) * inv \
        + params["b1"].astype(f32)
    h1 = jnp.maximum(h1, 0.0)
    z = jnp.dot(h1.astype(bf16), params["w2"].astype(bf16), preferred_element_type=f32) \
        + params["b2"].astype(f32)
    h2 = jnp.maximum(
        jnp.dot(z.astype(bf16), params["w3"].astype(bf16), preferred_element_type=f32)
        + params["b3"].astype(f32), 0.0)
    recon = jnp.dot(h2.astype(bf16), params["w4"].astype(bf16), preferred_element_type=f32) \
        + params["b4"].astype(f32)
    recon = recon + params["user_bias"][users].astype(f32) + params["movie_bias"].astype(f32)
    return recon, z


if __name__ == "__main__":
    # Small shapes consistent with the module's forward:
    #   data: (batch, num_movies), users: (batch,) int indices into user_bias.
    # Deliberately non-multiples of 8/128 to exercise the padding path.
    B, num_movies, hidden_dim, latent_dim, num_users = 6, 200, 72, 40, 16

    key = jax.random.PRNGKey(0)
    k_data, k_users, k_params = jax.random.split(key, 3)

    data = jax.random.normal(k_data, (B, num_movies), jnp.float32)
    users = jax.random.randint(k_users, (B,), 0, num_users)
    params = init_params(k_params, num_users, num_movies, hidden_dim, latent_dim)

    padded_params = prepare_params(params)          # pad/cast once, reuse across calls

    recon, z = ae_forward(data, users, padded_params, latent_dim=latent_dim)
    jax.block_until_ready((recon, z))

    recon_ref, z_ref = ae_forward_ref(data, users, params)
    assert recon.shape == (B, num_movies) and z.shape == (B, latent_dim)
    assert jnp.allclose(recon, recon_ref, atol=2e-3, rtol=2e-3)
    assert jnp.allclose(z, z_ref, atol=2e-3, rtol=2e-3)

    # bf16 reconstruction writeback (halves HBM writeback when downstream tolerates it).
    recon_bf, z_bf = ae_forward(data, users, padded_params, latent_dim=latent_dim,
                                recon_dtype=jnp.bfloat16)
    jax.block_until_ready((recon_bf, z_bf))
    assert recon_bf.dtype == jnp.bfloat16
    assert jnp.allclose(recon_bf.astype(jnp.float32), recon_ref, atol=5e-2, rtol=5e-2)

    print("KERNEL_OK")
</pallas_src>

<mosaic_0001>
module attributes {stable_mosaic.version = 11 : i64} {
  func.func @ae_forward_kernel(%arg0: i32, %arg1: memref<8x256xbf16, #tpu.memory_space<vmem>>, %arg2: memref<8x1xf32, #tpu.memory_space<vmem>>, %arg3: memref<256x128xbf16, #tpu.memory_space<vmem>>, %arg4: memref<1x128xf32, #tpu.memory_space<vmem>>, %arg5: memref<128x128xbf16, #tpu.memory_space<vmem>>, %arg6: memref<1x128xf32, #tpu.memory_space<vmem>>, %arg7: memref<128x128xbf16, #tpu.memory_space<vmem>>, %arg8: memref<1x128xf32, #tpu.memory_space<vmem>>, %arg9: memref<128x256xbf16, #tpu.memory_space<vmem>>, %arg10: memref<1x256xf32, #tpu.memory_space<vmem>>, %arg11: memref<8x256xf32, #tpu.memory_space<vmem>>, %arg12: memref<8x128xf32, #tpu.memory_space<vmem>>) attributes {dimension_semantics = [#tpu.dimension_semantics<parallel>], iteration_bounds = array<i64: 1>, scalar_prefetch = 0 : i64, scratch_operands = 0 : i64, tpu.core_type = #tpu.core_type<tc>, window_params = [{transform_indices = @transform_0, window_bounds = array<i64: 8, 256>}, {transform_indices = @transform_1, window_bounds = array<i64: 8, 1>}, {pipeline_mode = #tpu.pipeline_mode<synchronous>, transform_indices = @transform_2, window_bounds = array<i64: 256, 128>}, {pipeline_mode = #tpu.pipeline_mode<synchronous>, transform_indices = @transform_3, window_bounds = array<i64: 1, 128>}, {pipeline_mode = #tpu.pipeline_mode<synchronous>, transform_indices = @transform_4, window_bounds = array<i64: 128, 128>}, {pipeline_mode = #tpu.pipeline_mode<synchronous>, transform_indices = @transform_5, window_bounds = array<i64: 1, 128>}, {pipeline_mode = #tpu.pipeline_mode<synchronous>, transform_indices = @transform_6, window_bounds = array<i64: 128, 128>}, {pipeline_mode = #tpu.pipeline_mode<synchronous>, transform_indices = @transform_7, window_bounds = array<i64: 1, 128>}, {pipeline_mode = #tpu.pipeline_mode<synchronous>, transform_indices = @transform_8, window_bounds = array<i64: 128, 256>}, {pipeline_mode = #tpu.pipeline_mode<synchronous>, transform_indices = @transform_9, window_bounds = array<i64: 1, 256>}, {transform_indices = @transform_10, window_bounds = array<i64: 8, 256>}, {transform_indices = @transform_11, window_bounds = array<i64: 8, 128>}]} {
    %c0 = arith.constant 0 : index
    %c0_0 = arith.constant 0 : index
    %0 = vector.load %arg1[%c0, %c0_0] : memref<8x256xbf16, #tpu.memory_space<vmem>>, vector<8x256xbf16>
    %1 = arith.extf %0 : vector<8x256xbf16> to vector<8x256xf32>
    %2 = arith.mulf %1, %1 : vector<8x256xf32>
    %cst = arith.constant dense<0.000000e+00> : vector<8xf32>
    %3 = vector.multi_reduction <add>, %2, %cst [1] : vector<8x256xf32> to vector<8xf32>
    %4 = vector.shape_cast %3 : vector<8xf32> to vector<8x1xf32>
    %cst_1 = arith.constant 1.000000e-24 : f32
    %5 = vector.broadcast %cst_1 : f32 to vector<8x1xf32>
    %6 = arith.maximumf %4, %5 : vector<8x1xf32>
    %7 = math.rsqrt %6 : vector<8x1xf32>
    %c0_2 = arith.constant 0 : index
    %c0_3 = arith.constant 0 : index
    %8 = vector.load %arg3[%c0_2, %c0_3] : memref<256x128xbf16, #tpu.memory_space<vmem>>, vector<256x128xbf16>
    %cst_4 = arith.constant dense<0.000000e+00> : vector<8x128xf32>
    %9 = tpu.matmul %0, %8, %cst_4 {dimension_numbers = #tpu.dot_dimension_numbers<[1], [0], [0], [1], [0, 0, 1, 1], [], []>} : vector<8x256xbf16>, vector<256x128xbf16>, vector<8x128xf32> -> vector<8x128xf32>
    %10 = vector.broadcast %7 : vector<8x1xf32> to vector<8x128xf32>
    %11 = arith.mulf %9, %10 : vector<8x128xf32>
    %c0_5 = arith.constant 0 : index
    %c0_6 = arith.constant 0 : index
    %12 = vector.load %arg4[%c0_5, %c0_6] : memref<1x128xf32, #tpu.memory_space<vmem>>, vector<1x128xf32>
    %13 = vector.broadcast %12 : vector<1x128xf32> to vector<8x128xf32>
    %14 = arith.addf %11, %13 : vector<8x128xf32>
    %cst_7 = arith.constant 0.000000e+00 : f32
    %15 = vector.broadcast %cst_7 : f32 to vector<8x128xf32>
    %16 = arith.maximumf %14, %15 : vector<8x128xf32>
    %17 = arith.truncf %16 : vector<8x128xf32> to vector<8x128xbf16>
    %c0_8 = arith.constant 0 : index
    %c0_9 = arith.constant 0 : index
    %18 = vector.load %arg5[%c0_8, %c0_9] : memref<128x128xbf16, #tpu.memory_space<vmem>>, vector<128x128xbf16>
    %cst_10 = arith.constant dense<0.000000e+00> : vector<8x128xf32>
    %19 = tpu.matmul %17, %18, %cst_10 {dimension_numbers = #tpu.dot_dimension_numbers<[1], [0], [0], [1], [0, 0, 1, 1], [], []>} : vector<8x128xbf16>, vector<128x128xbf16>, vector<8x128xf32> -> vector<8x128xf32>
    %c0_11 = arith.constant 0 : index
    %c0_12 = arith.constant 0 : index
    %20 = vector.load %arg6[%c0_11, %c0_12] : memref<1x128xf32, #tpu.memory_space<vmem>>, vector<1x128xf32>
    %21 = vector.broadcast %20 : vector<1x128xf32> to vector<8x128xf32>
    %22 = arith.addf %19, %21 : vector<8x128xf32>
    %23 = arith.truncf %22 : vector<8x128xf32> to vector<8x128xbf16>
    %c0_13 = arith.constant 0 : index
    %c0_14 = arith.constant 0 : index
    %24 = vector.load %arg7[%c0_13, %c0_14] : memref<128x128xbf16, #tpu.memory_space<vmem>>, vector<128x128xbf16>
    %cst_15 = arith.constant dense<0.000000e+00> : vector<8x128xf32>
    %25 = tpu.matmul %23, %24, %cst_15 {dimension_numbers = #tpu.dot_dimension_numbers<[1], [0], [0], [1], [0, 0, 1, 1], [], []>} : vector<8x128xbf16>, vector<128x128xbf16>, vector<8x128xf32> -> vector<8x128xf32>
    %c0_16 = arith.constant 0 : index
    %c0_17 = arith.constant 0 : index
    %26 = vector.load %arg8[%c0_16, %c0_17] : memref<1x128xf32, #tpu.memory_space<vmem>>, vector<1x128xf32>
    %27 = vector.broadcast %26 : vector<1x128xf32> to vector<8x128xf32>
    %28 = arith.addf %25, %27 : vector<8x128xf32>
    %cst_18 = arith.constant 0.000000e+00 : f32
    %29 = vector.broadcast %cst_18 : f32 to vector<8x128xf32>
    %30 = arith.maximumf %28, %29 : vector<8x128xf32>
    %31 = arith.truncf %30 : vector<8x128xf32> to vector<8x128xbf16>
    %c0_19 = arith.constant 0 : index
    %c0_20 = arith.constant 0 : index
    %32 = vector.load %arg9[%c0_19, %c0_20] : memref<128x256xbf16, #tpu.memory_space<vmem>>, vector<128x256xbf16>
    %cst_21 = arith.constant dense<0.000000e+00> : vector<8x256xf32>
    %33 = tpu.matmul %31, %32, %cst_21 {dimension_numbers = #tpu.dot_dimension_numbers<[1], [0], [0], [1], [0, 0, 1, 1], [], []>} : vector<8x128xbf16>, vector<128x256xbf16>, vector<8x256xf32> -> vector<8x256xf32>
    %c0_22 = arith.constant 0 : index
    %c0_23 = arith.constant 0 : index
    %34 = vector.load %arg10[%c0_22, %c0_23] : memref<1x256xf32, #tpu.memory_space<vmem>>, vector<1x256xf32>
    %35 = vector.broadcast %34 : vector<1x256xf32> to vector<8x256xf32>
    %36 = arith.addf %33, %35 : vector<8x256xf32>
    %c0_24 = arith.constant 0 : index
    %c0_25 = arith.constant 0 : index
    %37 = vector.load %arg2[%c0_24, %c0_25] : memref<8x1xf32, #tpu.memory_space<vmem>>, vector<8x1xf32>
    %38 = vector.broadcast %37 : vector<8x1xf32> to vector<8x256xf32>
    %39 = arith.addf %36, %38 : vector<8x256xf32>
    %c0_26 = arith.constant 0 : index
    %c0_27 = arith.constant 0 : index
    %40 = vector.load %arg11[%c0_26, %c0_27] : memref<8x256xf32, #tpu.memory_space<vmem>>, vector<8x256xf32>
    tpu.vector_store %arg11[%c0_26, %c0_27], %39 {strides = array<i32>} : memref<8x256xf32, #tpu.memory_space<vmem>>, vector<8x256xf32>,
    %c0_28 = arith.constant 0 : index
    %c0_29 = arith.constant 0 : index
    %41 = vector.load %arg12[%c0_28, %c0_29] : memref<8x128xf32, #tpu.memory_space<vmem>>, vector<8x128xf32>
    tpu.vector_store %arg12[%c0_28, %c0_29], %22 {strides = array<i32>} : memref<8x128xf32, #tpu.memory_space<vmem>>, vector<8x128xf32>,
    return
  }
  func.func @transform_0(%arg0: i32) -> (i32, i32) {
    %c0_i32 = arith.constant 0 : i32
    %c0_i32_0 = arith.constant 0 : i32
    return %arg0, %c0_i32 : i32, i32
  }
  func.func @transform_1(%arg0: i32) -> (i32, i32) {
    %c0_i32 = arith.constant 0 : i32
    %c0_i32_0 = arith.constant 0 : i32
    return %arg0, %c0_i32 : i32, i32
  }
  func.func @transform_2(%arg0: i32) -> (i32, i32) {
    %c0_i32 = arith.constant 0 : i32
    %c0_i32_0 = arith.constant 0 : i32
    %c0_i32_1 = arith.constant 0 : i32
    return %c0_i32, %c0_i32_0 : i32, i32
  }
  func.func @transform_3(%arg0: i32) -> (i32, i32) {
    %c0_i32 = arith.constant 0 : i32
    %c0_i32_0 = arith.constant 0 : i32
    %c0_i32_1 = arith.constant 0 : i32
    return %c0_i32, %c0_i32_0 : i32, i32
  }
  func.func @transform_4(%arg0: i32) -> (i32, i32) {
    %c0_i32 = arith.constant 0 : i32
    %c0_i32_0 = arith.constant 0 : i32
    %c0_i32_1 = arith.constant 0 : i32
    return %c0_i32, %c0_i32_0 : i32, i32
  }
  func.func @transform_5(%arg0: i32) -> (i32, i32) {
    %c0_i32 = arith.constant 0 : i32
    %c0_i32_0 = arith.constant 0 : i32
    %c0_i32_1 = arith.constant 0 : i32
    return %c0_i32, %c0_i32_0 : i32, i32
  }
  func.func @transform_6(%arg0: i32) -> (i32, i32) {
    %c0_i32 = arith.constant 0 : i32
    %c0_i32_0 = arith.constant 0 : i32
    %c0_i32_1 = arith.constant 0 : i32
    return %c0_i32, %c0_i32_0 : i32, i32
  }
  func.func @transform_7(%arg0: i32) -> (i32, i32) {
    %c0_i32 = arith.constant 0 : i32
    %c0_i32_0 = arith.constant 0 : i32
    %c0_i32_1 = arith.constant 0 : i32
    return %c0_i32, %c0_i32_0 : i32, i32
  }
  func.func @transform_8(%arg0: i32) -> (i32, i32) {
    %c0_i32 = arith.constant 0 : i32
    %c0_i32_0 = arith.constant 0 : i32
    %c0_i32_1 = arith.constant 0 : i32
    return %c0_i32, %c0_i32_0 : i32, i32
  }
  func.func @transform_9(%arg0: i32) -> (i32, i32) {
    %c0_i32 = arith.constant 0 : i32
    %c0_i32_0 = arith.constant 0 : i32
    %c0_i32_1 = arith.constant 0 : i32
    return %c0_i32, %c0_i32_0 : i32, i32
  }
  func.func @transform_10(%arg0: i32) -> (i32, i32) {
    %c0_i32 = arith.constant 0 : i32
    %c0_i32_0 = arith.constant 0 : i32
    return %arg0, %c0_i32 : i32, i32
  }
  func.func @transform_11(%arg0: i32) -> (i32, i32) {
    %c0_i32 = arith.constant 0 : i32
    %c0_i32_0 = arith.constant 0 : i32
    return %arg0, %c0_i32 : i32, i32
  }
}

</mosaic_0001>

<llo_original>
// kernel: ae_forward.1
$region0: #{ae_forward.1}
  #allocation0 [shape = 'u32[]', space=smem, size = 0x4, offset = 0x4, fixed_abs, tag = 'smem constant byte address 0x4 - core index']
  #allocation1 [shape = 'u32[144,128]{1,0:T(1,128)}', space=vmem, size = 0x12000, scoped, tag = 'internal scratch']
  %s0 = inlined_call_operand.vmem [shape: bf16[8,256], index: 0, kind: input, shape index: {}]
  %s1 = inlined_call_operand.vmem [shape: f32[8,1], index: 1, kind: input, shape index: {}]
  %s2 = inlined_call_operand.vmem [shape: bf16[256,128], index: 2, kind: input, shape index: {}]
  %s3 = inlined_call_operand.vmem [shape: f32[1,128], index: 3, kind: input, shape index: {}]
  %s4 = inlined_call_operand.vmem [shape: bf16[128,128], index: 4, kind: input, shape index: {}]
  %s5 = inlined_call_operand.vmem [shape: f32[1,128], index: 5, kind: input, shape index: {}]
  %s6 = inlined_call_operand.vmem [shape: bf16[128,128], index: 6, kind: input, shape index: {}]
  %s7 = inlined_call_operand.vmem [shape: f32[1,128], index: 7, kind: input, shape index: {}]
  %s8 = inlined_call_operand.vmem [shape: bf16[128,256], index: 8, kind: input, shape index: {}]
  %s9 = inlined_call_operand.vmem [shape: f32[1,256], index: 9, kind: input, shape index: {}]
  %s10 = inlined_call_operand.hbm [shape: f32[8,256], index: 10, kind: output, shape index: {0}]
  %s11 = inlined_call_operand.hbm [shape: f32[8,128], index: 11, kind: output, shape index: {1}]
  %12 = xla_tuple %s10, %s11
  %s13 = sld [smem:[#allocation0]]
  $region58: #{ae_forward.1} parent=0
    _
  %s15 = ssub.s32 1, %s13
  %s16 = scalar_select 0, %s15, %s13
  $region1: #{ae_forward.1} parent=0
    #allocation2 [shape = 'u8[8192]{0}', space=vmem, size = 0x2000, scoped, tag = 'output window, operand 0, single buffered']
    #allocation3 [shape = 's32[1]{0}', space=sflag, size = 0x4, scoped, tag = 'scoped memory for ae_forward.1']
    #allocation4 [shape = 'u8[4096]{0}', space=vmem, size = 0x1000, scoped, tag = 'output window, operand 1, single buffered']
    #allocation5 [shape = 's32[1]{0}', space=sflag, size = 0x4, scoped, tag = 'scoped memory for ae_forward.1']
    %17 = vsyncpa [#allocation3], 0
    %18 = vsyncpa [#allocation5], 0
    // Predicated region
    $region2: #{ae_forward.1} parent=1 // pred_check
      _
    $region3: #{ae_forward.1} parent=1 // pred_check_branch
      %20 = sbr.rel (0) target = $region5
    $region4: #{ae_forward.1} parent=1 // pred_region
      _
    $region5: #{ae_forward.1} parent=1 // pred_fallthru
      _
    // Predicated region
    $region6: #{ae_forward.1} parent=1 // pred_check
      _
    $region7: #{ae_forward.1} parent=1 // pred_check_branch
      %22 = sbr.rel (0) target = $region9
    $region8: #{ae_forward.1} parent=1 // pred_region
      _
    $region9: #{ae_forward.1} parent=1 // pred_fallthru
      _
    // Predicated region
    $region10: #{ae_forward.1} parent=1 // pred_check
      _
    $region11: #{ae_forward.1} parent=1 // pred_check_branch
      %24 = sbr.rel (0) target = $region13
    $region12: #{ae_forward.1} parent=1 // pred_region
      _
    $region13: #{ae_forward.1} parent=1 // pred_fallthru
      _
    // Predicated region
    $region14: #{ae_forward.1} parent=1 // pred_check
      _
    $region15: #{ae_forward.1} parent=1 // pred_check_branch
      %26 = sbr.rel (0) target = $region17
    $region16: #{ae_forward.1} parent=1 // pred_region
      _
    $region17: #{ae_forward.1} parent=1 // pred_fallthru
      _
    // Predicated region
    $region18: #{ae_forward.1} parent=1 // pred_check
      _
    $region19: #{ae_forward.1} parent=1 // pred_check_branch
      %28 = sbr.rel (0) target = $region21
    $region20: #{ae_forward.1} parent=1 // pred_region
      _
    $region21: #{ae_forward.1} parent=1 // pred_fallthru
      _
    // Predicated region
    $region22: #{ae_forward.1} parent=1 // pred_check
      _
    $region23: #{ae_forward.1} parent=1 // pred_check_branch
      %30 = sbr.rel (0) target = $region25
    $region24: #{ae_forward.1} parent=1 // pred_region
      _
    $region25: #{ae_forward.1} parent=1 // pred_fallthru
      _
    // Predicated region
    $region26: #{ae_forward.1} parent=1 // pred_check
      _
    $region27: #{ae_forward.1} parent=1 // pred_check_branch
      %32 = sbr.rel (0) target = $region29
    $region28: #{ae_forward.1} parent=1 // pred_region
      _
    $region29: #{ae_forward.1} parent=1 // pred_fallthru
      _
    // Predicated region
    $region30: #{ae_forward.1} parent=1 // pred_check
      _
    $region31: #{ae_forward.1} parent=1 // pred_check_branch
      %34 = sbr.rel (0) target = $region33
    $region32: #{ae_forward.1} parent=1 // pred_region
      _
    $region33: #{ae_forward.1} parent=1 // pred_fallthru
      _
    // Predicated region
    $region34: #{ae_forward.1} parent=1 // pred_check
      _
    $region35: #{ae_forward.1} parent=1 // pred_check_branch
      %36 = sbr.rel (0) target = $region37
    $region36: #{ae_forward.1} parent=1 // pred_region
      _
    $region37: #{ae_forward.1} parent=1 // pred_fallthru
      _
    // Predicated region
    $region38: #{ae_forward.1} parent=1 // pred_check
      _
    $region39: #{ae_forward.1} parent=1 // pred_check_branch
      %38 = sbr.rel (0) target = $region41
    $region40: #{ae_forward.1} parent=1 // pred_region
      _
    $region41: #{ae_forward.1} parent=1 // pred_fallthru
      _
    %v40 = vld [vmem:[%s0] sm:$0xff]
    %v41 = vunpack.c.l.bf16 %v40
    %v42 = vunpack.c.h.bf16 %v40
    %v43 = vmul.f32 %v41, %v41
    %v44 = vmul.f32 %v42, %v42
    %v45 = vadd.f32 %v43, %v44
    %46 = vadd.xlane.f32.xlu0 %v45
    %v47 = vpop.xlane.xlu0 %46
    %v48 = vmax.f32 %v47, 1e-24
    %v49 = vrsqrt.pop %v48
    %v50 = vld [vmem:[%s2] sm:$0xf]
    %v51 = vld [vmem:[%s2 + $0x4] sm:$0xf]
    %v52 = vld [vmem:[%s2 + $0x8] sm:$0xf]
    %v53 = vld [vmem:[%s2 + $0xc] sm:$0xf]
    %v54 = vld [vmem:[%s2 + $0x10] sm:$0xf]
    %v55 = vld [vmem:[%s2 + $0x14] sm:$0xf]
    %v56 = vld [vmem:[%s2 + $0x18] sm:$0xf]
    %v57 = vld [vmem:[%s2 + $0x1c] sm:$0xf]
    %v58 = vld [vmem:[%s2 + $0x20] sm:$0xf]
    %v59 = vld [vmem:[%s2 + $0x24] sm:$0xf]
    %v60 = vld [vmem:[%s2 + $0x28] sm:$0xf]
    %v61 = vld [vmem:[%s2 + $0x2c] sm:$0xf]
    %v62 = vld [vmem:[%s2 + $0x30] sm:$0xf]
    %v63 = vld [vmem:[%s2 + $0x34] sm:$0xf]
    %v64 = vld [vmem:[%s2 + $0x38] sm:$0xf]
    %v65 = vld [vmem:[%s2 + $0x3c] sm:$0xf]
    %v66 = vld [vmem:[%s2 + $0x40] sm:$0xf]
    %v67 = vld [vmem:[%s2 + $0x44] sm:$0xf]
    %v68 = vld [vmem:[%s2 + $0x48] sm:$0xf]
    %v69 = vld [vmem:[%s2 + $0x4c] sm:$0xf]
    %v70 = vld [vmem:[%s2 + $0x50] sm:$0xf]
    %v71 = vld [vmem:[%s2 + $0x54] sm:$0xf]
    %v72 = vld [vmem:[%s2 + $0x58] sm:$0xf]
    %v73 = vld [vmem:[%s2 + $0x5c] sm:$0xf]
    %v74 = vld [vmem:[%s2 + $0x60] sm:$0xf]
    %v75 = vld [vmem:[%s2 + $0x64] sm:$0xf]
    %v76 = vld [vmem:[%s2 + $0x68] sm:$0xf]
    %v77 = vld [vmem:[%s2 + $0x6c] sm:$0xf]
    %v78 = vld [vmem:[%s2 + $0x70] sm:$0xf]
    %v79 = vld [vmem:[%s2 + $0x74] sm:$0xf]
    %v80 = vld [vmem:[%s2 + $0x78] sm:$0xf]
    %v81 = vld [vmem:[%s2 + $0x7c] sm:$0xf]
    %v83 = vunpack.c.l.b16 %v40
    %v84 = vunpack.c.h.b16 %v40
    %v85 = vpack.c.b16 %v83, %v83
    %v86 = vpack.c.b16 %v84, %v84
    %v121 = vunpack.c.l.b16 %v50
    %v122 = vunpack.c.l.b16 %v51
    %v123 = vunpack.c.l.b16 %v52
    %v124 = vunpack.c.l.b16 %v53
    %v125 = vunpack.c.l.b16 %v54
    %v126 = vunpack.c.l.b16 %v55
    %v127 = vunpack.c.l.b16 %v56
    %v128 = vunpack.c.l.b16 %v57
    %v129 = vunpack.c.l.b16 %v58
    %v130 = vunpack.c.l.b16 %v59
    %v131 = vunpack.c.l.b16 %v60
    %v132 = vunpack.c.l.b16 %v61
    %v133 = vunpack.c.l.b16 %v62
    %v134 = vunpack.c.l.b16 %v63
    %v135 = vunpack.c.l.b16 %v64
    %v136 = vunpack.c.l.b16 %v65
    %v137 = vunpack.c.l.b16 %v66
    %v138 = vunpack.c.l.b16 %v67
    %v139 = vunpack.c.l.b16 %v68
    %v140 = vunpack.c.l.b16 %v69
    %v141 = vunpack.c.l.b16 %v70
    %v142 = vunpack.c.l.b16 %v71
    %v143 = vunpack.c.l.b16 %v72
    %v144 = vunpack.c.l.b16 %v73
    %v145 = vunpack.c.l.b16 %v74
    %v146 = vunpack.c.l.b16 %v75
    %v147 = vunpack.c.l.b16 %v76
    %v148 = vunpack.c.l.b16 %v77
    %v149 = vunpack.c.l.b16 %v78
    %v150 = vunpack.c.l.b16 %v79
    %v151 = vunpack.c.l.b16 %v80
    %v152 = vunpack.c.l.b16 %v81
    %v153 = vpack.c.b16 %v122, %v121
    %v154 = vpack.c.b16 %v124, %v123
    %v155 = vpack.c.b16 %v126, %v125
    %v156 = vpack.c.b16 %v128, %v127
    %v157 = vpack.c.b16 %v130, %v129
    %v158 = vpack.c.b16 %v132, %v131
    %v159 = vpack.c.b16 %v134, %v133
    %v160 = vpack.c.b16 %v136, %v135
    %v161 = vpack.c.b16 %v138, %v137
    %v162 = vpack.c.b16 %v140, %v139
    %v163 = vpack.c.b16 %v142, %v141
    %v164 = vpack.c.b16 %v144, %v143
    %v165 = vpack.c.b16 %v146, %v145
    %v166 = vpack.c.b16 %v148, %v147
    %v167 = vpack.c.b16 %v150, %v149
    %v168 = vpack.c.b16 %v152, %v151
    %185 = vmatprep.subr.bf16.mxu0 0
    %186 = vmatpush1.bf16.msra.mxu0 %v153
    %187 = vmatprep.subr.bf16.mxu0 0
    %188 = vmatpush1.bf16.msra.mxu0 %v154
    %189 = vmatprep.subr.bf16.mxu0 0
    %190 = vmatpush1.bf16.msra.mxu0 %v155
    %191 = vmatprep.subr.bf16.mxu0 0
    %192 = vmatpush1.bf16.msra.mxu0 %v156
    %193 = vmatprep.subr.bf16.mxu0 0
    %194 = vmatpush1.bf16.msra.mxu0 %v157
    %195 = vmatprep.subr.bf16.mxu0 0
    %196 = vmatpush1.bf16.msra.mxu0 %v158
    %197 = vmatprep.subr.bf16.mxu0 0
    %198 = vmatpush1.bf16.msra.mxu0 %v159
    %199 = vmatprep.subr.bf16.mxu0 0
    %200 = vmatpush1.bf16.msra.mxu0 %v160
    %201 = vmatprep.subr.bf16.mxu0 0
    %202 = vmatpush1.bf16.msra.mxu0 %v161
    %203 = vmatprep.subr.bf16.mxu0 0
    %204 = vmatpush1.bf16.msra.mxu0 %v162
    %205 = vmatprep.subr.bf16.mxu0 0
    %206 = vmatpush1.bf16.msra.mxu0 %v163
    %207 = vmatprep.subr.bf16.mxu0 0
    %208 = vmatpush1.bf16.msra.mxu0 %v164
    %209 = vmatprep.subr.bf16.mxu0 0
    %210 = vmatpush1.bf16.msra.mxu0 %v165
    %211 = vmatprep.subr.bf16.mxu0 0
    %212 = vmatpush1.bf16.msra.mxu0 %v166
    %213 = vmatprep.subr.bf16.mxu0 0
    %214 = vmatpush1.bf16.msra.mxu0 %v167
    %215 = vmatprep.subr.bf16.mxu0 0
    %216 = vmatpush1.bf16.msra.mxu0 %v168
    %217 = vmatprep.mubr.bf16.mxu0 %v86
    %218 = vmatmul.mubr.bf16.gmra.mrb[0].mxu0 %v85
    %v219 = vpop.f32.mrb[0].mxu0
    %v220 = vadd.f32 0.0, %v219
    %v221 = vpop.f32.mrb[0].mxu0
    %v222 = vpop.f32.mrb[0].mxu0
    %v223 = vpop.f32.mrb[0].mxu0
    %224 = vdwg.mxu0
    %v225 = vmul.f32 %v220, %v49
    %v226 = vld [vmem:[%s3] sm:$0x1]
    %v228 = vlaneseq
    %v229 = vshrl.u32 %v228, 7
    %v230 = vsub.s32 0, %v229
    %v231 = vrot.slane %v226, %v230
    %v233 = vadd.f32 %v225, %v231
    %v234 = vmax.f32 %v233, 0.0
    %v235 = vpack.c.bf16 %v234, %v234
    %v236 = vld [vmem:[%s4] sm:$0xf]
    %v237 = vld [vmem:[%s4 + $0x4] sm:$0xf]
    %v238 = vld [vmem:[%s4 + $0x8] sm:$0xf]
    %v239 = vld [vmem:[%s4 + $0xc] sm:$0xf]
    %v240 = vld [vmem:[%s4 + $0x10] sm:$0xf]
    %v241 = vld [vmem:[%s4 + $0x14] sm:$0xf]
    %v242 = vld [vmem:[%s4 + $0x18] sm:$0xf]
    %v243 = vld [vmem:[%s4 + $0x1c] sm:$0xf]
    %v244 = vld [vmem:[%s4 + $0x20] sm:$0xf]
    %v245 = vld [vmem:[%s4 + $0x24] sm:$0xf]
    %v246 = vld [vmem:[%s4 + $0x28] sm:$0xf]
    %v247 = vld [vmem:[%s4 + $0x2c] sm:$0xf]
    %v248 = vld [vmem:[%s4 + $0x30] sm:$0xf]
    %v249 = vld [vmem:[%s4 + $0x34] sm:$0xf]
    %v250 = vld [vmem:[%s4 + $0x38] sm:$0xf]
    %v251 = vld [vmem:[%s4 + $0x3c] sm:$0xf]
    %v252 = vld [vmem:[%s5] sm:$0x1]
    %v254 = vlaneseq
    %v255 = vshrl.u32 %v254, 7
    %v256 = vsub.s32 0, %v255
    %v257 = vrot.slane %v252, %v256
    %v275 = vunpack.c.l.b16 %v236
    %v276 = vunpack.c.l.b16 %v237
    %v277 = vunpack.c.l.b16 %v238
    %v278 = vunpack.c.l.b16 %v239
    %v279 = vunpack.c.l.b16 %v240
    %v280 = vunpack.c.l.b16 %v241
    %v281 = vunpack.c.l.b16 %v242
    %v282 = vunpack.c.l.b16 %v243
    %v283 = vunpack.c.l.b16 %v244
    %v284 = vunpack.c.l.b16 %v245
    %v285 = vunpack.c.l.b16 %v246
    %v286 = vunpack.c.l.b16 %v247
    %v287 = vunpack.c.l.b16 %v248
    %v288 = vunpack.c.l.b16 %v249
    %v289 = vunpack.c.l.b16 %v250
    %v290 = vunpack.c.l.b16 %v251
    %v291 = vpack.c.b16 %v276, %v275
    %v292 = vpack.c.b16 %v278, %v277
    %v293 = vpack.c.b16 %v280, %v279
    %v294 = vpack.c.b16 %v282, %v281
    %v295 = vpack.c.b16 %v284, %v283
    %v296 = vpack.c.b16 %v286, %v285
    %v297 = vpack.c.b16 %v288, %v287
    %v298 = vpack.c.b16 %v290, %v289
    %307 = vmatprep.subr.bf16.mxu0 0
    %308 = vmatpush1.bf16.msra.mxu0 %v291
    %309 = vmatprep.subr.bf16.mxu0 0
    %310 = vmatpush1.bf16.msra.mxu0 %v292
    %311 = vmatprep.subr.bf16.mxu0 0
    %312 = vmatpush1.bf16.msra.mxu0 %v293
    %313 = vmatprep.subr.bf16.mxu0 0
    %314 = vmatpush1.bf16.msra.mxu0 %v294
    %315 = vmatprep.subr.bf16.mxu0 0
    %316 = vmatpush1.bf16.msra.mxu0 %v295
    %317 = vmatprep.subr.bf16.mxu0 0
    %318 = vmatpush1.bf16.msra.mxu0 %v296
    %319 = vmatprep.subr.bf16.mxu0 0
    %320 = vmatpush1.bf16.msra.mxu0 %v297
    %321 = vmatprep.subr.bf16.mxu0 0
    %322 = vmatpush1.bf16.msra.mxu0 %v298
    %323 = vmatprep.subr.bf16.mxu0 0
    %324 = vmatpush1.bf16.msra.mxu0 0
    %325 = vmatprep.subr.bf16.mxu0 0
    %326 = vmatpush1.bf16.msra.mxu0 0
    %327 = vmatprep.subr.bf16.mxu0 0
    %328 = vmatpush1.bf16.msra.mxu0 0
    %329 = vmatprep.subr.bf16.mxu0 0
    %330 = vmatpush1.bf16.msra.mxu0 0
    %331 = vmatprep.subr.bf16.mxu0 0
    %332 = vmatpush1.bf16.msra.mxu0 0
    %333 = vmatprep.subr.bf16.mxu0 0
    %334 = vmatpush1.bf16.msra.mxu0 0
    %335 = vmatprep.subr.bf16.mxu0 0
    %336 = vmatpush1.bf16.msra.mxu0 0
    %337 = vmatprep.subr.bf16.mxu0 0
    %338 = vmatpush1.bf16.msra.mxu0 0
    %339 = vmatprep.mubr.bf16.mxu0 0
    %340 = vmatmul.mubr.bf16.gmra.mrb[0].mxu0 %v235
    %v341 = vpop.f32.mrb[0].mxu0
    %v342 = vadd.f32 %v257, %v341
    %v343 = vpop.f32.mrb[0].mxu0
    %v344 = vpop.f32.mrb[0].mxu0
    %v345 = vpop.f32.mrb[0].mxu0
    %346 = vdwg.mxu0
    %v347 = vpack.c.bf16 %v342, %v342
    %v348 = vld [vmem:[%s6] sm:$0xf]
    %v349 = vld [vmem:[%s6 + $0x4] sm:$0xf]
    %v350 = vld [vmem:[%s6 + $0x8] sm:$0xf]
    %v351 = vld [vmem:[%s6 + $0xc] sm:$0xf]
    %v352 = vld [vmem:[%s6 + $0x10] sm:$0xf]
    %v353 = vld [vmem:[%s6 + $0x14] sm:$0xf]
    %v354 = vld [vmem:[%s6 + $0x18] sm:$0xf]
    %v355 = vld [vmem:[%s6 + $0x1c] sm:$0xf]
    %v356 = vld [vmem:[%s6 + $0x20] sm:$0xf]
    %v357 = vld [vmem:[%s6 + $0x24] sm:$0xf]
    %v358 = vld [vmem:[%s6 + $0x28] sm:$0xf]
    %v359 = vld [vmem:[%s6 + $0x2c] sm:$0xf]
    %v360 = vld [vmem:[%s6 + $0x30] sm:$0xf]
    %v361 = vld [vmem:[%s6 + $0x34] sm:$0xf]
    %v362 = vld [vmem:[%s6 + $0x38] sm:$0xf]
    %v363 = vld [vmem:[%s6 + $0x3c] sm:$0xf]
    %v364 = vld [vmem:[%s7] sm:$0x1]
    %v366 = vlaneseq
    %v367 = vshrl.u32 %v366, 7
    %v368 = vsub.s32 0, %v367
    %v369 = vrot.slane %v364, %v368
    %v387 = vunpack.c.l.b16 %v348
    %v388 = vunpack.c.l.b16 %v349
    %v389 = vunpack.c.l.b16 %v350
    %v390 = vunpack.c.l.b16 %v351
    %v391 = vunpack.c.l.b16 %v352
    %v392 = vunpack.c.l.b16 %v353
    %v393 = vunpack.c.l.b16 %v354
    %v394 = vunpack.c.l.b16 %v355
    %v395 = vunpack.c.l.b16 %v356
    %v396 = vunpack.c.l.b16 %v357
    %v397 = vunpack.c.l.b16 %v358
    %v398 = vunpack.c.l.b16 %v359
    %v399 = vunpack.c.l.b16 %v360
    %v400 = vunpack.c.l.b16 %v361
    %v401 = vunpack.c.l.b16 %v362
    %v402 = vunpack.c.l.b16 %v363
    %v403 = vpack.c.b16 %v388, %v387
    %v404 = vpack.c.b16 %v390, %v389
    %v405 = vpack.c.b16 %v392, %v391
    %v406 = vpack.c.b16 %v394, %v393
    %v407 = vpack.c.b16 %v396, %v395
    %v408 = vpack.c.b16 %v398, %v397
    %v409 = vpack.c.b16 %v400, %v399
    %v410 = vpack.c.b16 %v402, %v401
    %419 = vmatprep.subr.bf16.mxu0 0
    %420 = vmatpush1.bf16.msra.mxu0 %v403
    %421 = vmatprep.subr.bf16.mxu0 0
    %422 = vmatpush1.bf16.msra.mxu0 %v404
    %423 = vmatprep.subr.bf16.mxu0 0
    %424 = vmatpush1.bf16.msra.mxu0 %v405
    %425 = vmatprep.subr.bf16.mxu0 0
    %426 = vmatpush1.bf16.msra.mxu0 %v406
    %427 = vmatprep.subr.bf16.mxu0 0
    %428 = vmatpush1.bf16.msra.mxu0 %v407
    %429 = vmatprep.subr.bf16.mxu0 0
    %430 = vmatpush1.bf16.msra.mxu0 %v408
    %431 = vmatprep.subr.bf16.mxu0 0
    %432 = vmatpush1.bf16.msra.mxu0 %v409
    %433 = vmatprep.subr.bf16.mxu0 0
    %434 = vmatpush1.bf16.msra.mxu0 %v410
    %435 = vmatprep.subr.bf16.mxu0 0
    %436 = vmatpush1.bf16.msra.mxu0 0
    %437 = vmatprep.subr.bf16.mxu0 0
    %438 = vmatpush1.bf16.msra.mxu0 0
    %439 = vmatprep.subr.bf16.mxu0 0
    %440 = vmatpush1.bf16.msra.mxu0 0
    %441 = vmatprep.subr.bf16.mxu0 0
    %442 = vmatpush1.bf16.msra.mxu0 0
    %443 = vmatprep.subr.bf16.mxu0 0
    %444 = vmatpush1.bf16.msra.mxu0 0
    %445 = vmatprep.subr.bf16.mxu0 0
    %446 = vmatpush1.bf16.msra.mxu0 0
    %447 = vmatprep.subr.bf16.mxu0 0
    %448 = vmatpush1.bf16.msra.mxu0 0
    %449 = vmatprep.subr.bf16.mxu0 0
    %450 = vmatpush1.bf16.msra.mxu0 0
    %451 = vmatprep.mubr.bf16.mxu0 0
    %452 = vmatmul.mubr.bf16.gmra.mrb[0].mxu0 %v347
    %v453 = vpop.f32.mrb[0].mxu0
    %v454 = vadd.f32 %v369, %v453
    %v455 = vpop.f32.mrb[0].mxu0
    %v456 = vpop.f32.mrb[0].mxu0
    %v457 = vpop.f32.mrb[0].mxu0
    %458 = vdwg.mxu0
    %v459 = vmax.f32 %v454, 0.0
    %v460 = vpack.c.bf16 %v459, %v459
    %v461 = vld [vmem:[%s8] sm:$0xff]
    %v462 = vld [vmem:[%s8 + $0x8] sm:$0xff]
    %v463 = vld [vmem:[%s8 + $0x10] sm:$0xff]
    %v464 = vld [vmem:[%s8 + $0x18] sm:$0xff]
    %v465 = vld [vmem:[%s8 + $0x20] sm:$0xff]
    %v466 = vld [vmem:[%s8 + $0x28] sm:$0xff]
    %v467 = vld [vmem:[%s8 + $0x30] sm:$0xff]
    %v468 = vld [vmem:[%s8 + $0x38] sm:$0xff]
    %v469 = vld [vmem:[%s8 + $0x40] sm:$0xff]
    %v470 = vld [vmem:[%s8 + $0x48] sm:$0xff]
    %v471 = vld [vmem:[%s8 + $0x50] sm:$0xff]
    %v472 = vld [vmem:[%s8 + $0x58] sm:$0xff]
    %v473 = vld [vmem:[%s8 + $0x60] sm:$0xff]
    %v474 = vld [vmem:[%s8 + $0x68] sm:$0xff]
    %v475 = vld [vmem:[%s8 + $0x70] sm:$0xff]
    %v476 = vld [vmem:[%s8 + $0x78] sm:$0xff]
    %v477 = vld [vmem:[%s9] sm:$0x3]
    %v479 = vlaneseq
    %v480 = vshrl.u32 %v479, 7
    %v481 = vsub.s32 0, %v480
    %v482 = vrot.slane %v477, %v481
    %v483 = vlaneseq
    %v484 = vshrl.u32 %v483, 7
    %v485 = vsub.s32 1, %v484
    %v486 = vrot.slane %v477, %v485
    %v505 = vunpack.c.l.b16 %v461
    %v506 = vunpack.c.h.b16 %v461
    %v507 = vunpack.c.l.b16 %v462
    %v508 = vunpack.c.h.b16 %v462
    %v509 = vunpack.c.l.b16 %v463
    %v510 = vunpack.c.h.b16 %v463
    %v511 = vunpack.c.l.b16 %v464
    %v512 = vunpack.c.h.b16 %v464
    %v513 = vunpack.c.l.b16 %v465
    %v514 = vunpack.c.h.b16 %v465
    %v515 = vunpack.c.l.b16 %v466
    %v516 = vunpack.c.h.b16 %v466
    %v517 = vunpack.c.l.b16 %v467
    %v518 = vunpack.c.h.b16 %v467
    %v519 = vunpack.c.l.b16 %v468
    %v520 = vunpack.c.h.b16 %v468
    %v521 = vunpack.c.l.b16 %v469
    %v522 = vunpack.c.h.b16 %v469
    %v523 = vunpack.c.l.b16 %v470
    %v524 = vunpack.c.h.b16 %v470
    %v525 = vunpack.c.l.b16 %v471
    %v526 = vunpack.c.h.b16 %v471
    %v527 = vunpack.c.l.b16 %v472
    %v528 = vunpack.c.h.b16 %v472
    %v529 = vunpack.c.l.b16 %v473
    %v530 = vunpack.c.h.b16 %v473
    %v531 = vunpack.c.l.b16 %v474
    %v532 = vunpack.c.h.b16 %v474
    %v533 = vunpack.c.l.b16 %v475
    %v534 = vunpack.c.h.b16 %v475
    %v535 = vunpack.c.l.b16 %v476
    %v536 = vunpack.c.h.b16 %v476
    %v537 = vpack.c.b16 %v507, %v505
    %v538 = vpack.c.b16 %v508, %v506
    %v539 = vpack.c.b16 %v511, %v509
    %v540 = vpack.c.b16 %v512, %v510
    %v541 = vpack.c.b16 %v515, %v513
    %v542 = vpack.c.b16 %v516, %v514
    %v543 = vpack.c.b16 %v519, %v517
    %v544 = vpack.c.b16 %v520, %v518
    %v545 = vpack.c.b16 %v523, %v521
    %v546 = vpack.c.b16 %v524, %v522
    %v547 = vpack.c.b16 %v527, %v525
    %v548 = vpack.c.b16 %v528, %v526
    %v549 = vpack.c.b16 %v531, %v529
    %v550 = vpack.c.b16 %v532, %v530
    %v551 = vpack.c.b16 %v535, %v533
    %v552 = vpack.c.b16 %v536, %v534
    %569 = vmatprep.subr.bf16.mxu0 %v538
    %570 = vmatpush1.bf16.msra.mxu0 %v537
    %571 = vmatprep.subr.bf16.mxu0 %v540
    %572 = vmatpush1.bf16.msra.mxu0 %v539
    %573 = vmatprep.subr.bf16.mxu0 %v542
    %574 = vmatpush1.bf16.msra.mxu0 %v541
    %575 = vmatprep.subr.bf16.mxu0 %v544
    %576 = vmatpush1.bf16.msra.mxu0 %v543
    %577 = vmatprep.subr.bf16.mxu0 %v546
    %578 = vmatpush1.bf16.msra.mxu0 %v545
    %579 = vmatprep.subr.bf16.mxu0 %v548
    %580 = vmatpush1.bf16.msra.mxu0 %v547
    %581 = vmatprep.subr.bf16.mxu0 %v550
    %582 = vmatpush1.bf16.msra.mxu0 %v549
    %583 = vmatprep.subr.bf16.mxu0 %v552
    %584 = vmatpush1.bf16.msra.mxu0 %v551
    %585 = vmatprep.subr.bf16.mxu0 0
    %586 = vmatpush1.bf16.msra.mxu0 0
    %587 = vmatprep.subr.bf16.mxu0 0
    %588 = vmatpush1.bf16.msra.mxu0 0
    %589 = vmatprep.subr.bf16.mxu0 0
    %590 = vmatpush1.bf16.msra.mxu0 0
    %591 = vmatprep.subr.bf16.mxu0 0
    %592 = vmatpush1.bf16.msra.mxu0 0
    %593 = vmatprep.subr.bf16.mxu0 0
    %594 = vmatpush1.bf16.msra.mxu0 0
    %595 = vmatprep.subr.bf16.mxu0 0
    %596 = vmatpush1.bf16.msra.mxu0 0
    %597 = vmatprep.subr.bf16.mxu0 0
    %598 = vmatpush1.bf16.msra.mxu0 0
    %599 = vmatprep.subr.bf16.mxu0 0
    %600 = vmatpush1.bf16.msra.mxu0 0
    %601 = vmatprep.mubr.bf16.mxu0 0
    %602 = vmatmul.mubr.bf16.gmra.mrb[0].mxu0 %v460
    %v603 = vpop.f32.mrb[0].mxu0
    %v604 = vadd.f32 %v482, %v603
    %v605 = vpop.f32.mrb[0].mxu0
    %v606 = vadd.f32 %v486, %v605
    %v607 = vpop.f32.mrb[0].mxu0
    %v608 = vpop.f32.mrb[0].mxu0
    %609 = vdwg.mxu0
    %v610 = vld [vmem:[%s1] sm:$0xff]
    %612 = vset.pattern.permute.xlu0 0
    %613 = vperm.xlu0 %612, %v610
    %v614 = vpop.permute.xlu0 %613
    %v616 = vadd.f32 %v604, %v614
    %v617 = vadd.f32 %v606, %v614
    %618 = vst [vmem:[#allocation2] sm:$0xff] %v616
    %619 = vst [vmem:[#allocation2 + $0x8] sm:$0xff] %v617
    %620 = vst [vmem:[#allocation4] sm:$0xff] %v342
    // Predicated region
    $region42: #{ae_forward.1} parent=1 // pred_check
      _
    $region43: #{ae_forward.1} parent=1 // pred_check_branch
      %622 = sbr.rel (0) target = $region45
    $region44: #{ae_forward.1} parent=1 // pred_region
      %s624 = ssub.s32 256, 256
      %625 = vsyncadd [#allocation3], %s624
      %s627 = sshll.u32 [#allocation2], 4
      %s628 = int_to_ptr.vmem [resolvable:$true] %s627
      %630 = dma.vmem_to_hbm [thread:$0]  %s628, 256, %s10, [#allocation3]
    $region45: #{ae_forward.1} parent=1 // pred_fallthru
      _
    // Predicated region
    $region46: #{ae_forward.1} parent=1 // pred_check
      _
    $region47: #{ae_forward.1} parent=1 // pred_check_branch
      %632 = sbr.rel (0) target = $region49
    $region48: #{ae_forward.1} parent=1 // pred_region
      %s634 = ssub.s32 128, 128
      %635 = vsyncadd [#allocation5], %s634
      %s637 = sshll.u32 [#allocation4], 4
      %s638 = int_to_ptr.vmem [resolvable:$true] %s637
      %640 = dma.vmem_to_hbm [thread:$0]  %s638, 128, %s11, [#allocation5]
    $region49: #{ae_forward.1} parent=1 // pred_fallthru
      _
    // Predicated region
    $region50: #{ae_forward.1} parent=1 // pred_check
      _
    $region51: #{ae_forward.1} parent=1 // pred_check_branch
      %642 = sbr.rel (0) target = $region53
    $region52: #{ae_forward.1} parent=1 // pred_region
      %643 = dma.done [#allocation3], 256
    $region53: #{ae_forward.1} parent=1 // pred_fallthru
      _
    // Predicated region
    $region54: #{ae_forward.1} parent=1 // pred_check
      _
    $region55: #{ae_forward.1} parent=1 // pred_check_branch
      %645 = sbr.rel (0) target = $region57
    $region56: #{ae_forward.1} parent=1 // pred_region
      %646 = dma.done [#allocation5], 128
    $region57: #{ae_forward.1} parent=1 // pred_fallthru
      _
    %647 = vsyncpa [#allocation3], 1
    %648 = vsyncpa [#allocation5], 1

</llo_original>
